<compile_context>
chip_gen: v7x
topology: tpu7x:2x2x1
jax: 0.10.0
libtpu: 0.0.40
codegen_flags: <defaults>
</compile_context>

<pallas_src>
import numpy as np
import jax
import jax.numpy as jnp
from jax.experimental import pallas as pl
from jax.experimental.pallas import tpu as pltpu

_LOG_2PI = float(np.log(2.0 * np.pi))


# ----------------------------------------------------------------------------
# Helpers
# ----------------------------------------------------------------------------
def _round_up(x, m):
    return ((x + m - 1) // m) * m


def _pick_tile_n(n, d, max_tile=4096, target_bytes=2 << 20):
    """Rows per grid step.

    Multiple of 128 so the lane-dense (1, TILE_N) log_p block is always legal,
    large enough (~2 MiB/block) to amortize per-step overhead, small enough
    that double-buffered in/out blocks stay far below scoped VMEM limits on
    v5e/v6e/v7x.
    """
    per_row_bytes = max(1, d) * 4
    t = max(128, min(max_tile, target_bytes // per_row_bytes))
    t = max(128, (t // 128) * 128)
    t = min(t, _round_up(n, 128))       # do not over-tile tiny problems
    return max(t, 128)


def _row_neg_half_sq_sum(eps_f32):
    """Lane-dense per-row 0.5*sum(eps^2): (TN, D) -> (1, TN) via dot_general."""
    d = eps_f32.shape[-1]
    half_sq = 0.5 * eps_f32 * eps_f32
    ones_row = jnp.ones((1, d), dtype=jnp.float32)
    # Contract last dims of both operands (same pattern as q @ k^T in flash
    # attention) -> output is already laid out along lanes.
    return jax.lax.dot_general(
        ones_row, half_sq,
        dimension_numbers=(((1,), (1,)), ((), ())),
        preferred_element_type=jnp.float32)            # (1, TN)


# ----------------------------------------------------------------------------
# Kernels
# ----------------------------------------------------------------------------
def _forward_kernel(eps_ref, loc_ref, log_scale_ref, z_ref, logp_ref):
    """Sample + log-prob for one row tile."""
    eps = eps_ref[...].astype(jnp.float32)             # (TN, D)
    loc = loc_ref[...].astype(jnp.float32)             # (1, D)
    log_scale = log_scale_ref[...].astype(jnp.float32)  # (1, D)

    scale = jnp.exp(log_scale)                          # (1, D): EUP cost O(D) only
    z_ref[...] = (loc + scale * eps).astype(z_ref.dtype)

    d = eps.shape[-1]
    # Hoisted: sum(log_scale) computed once per tile as a (1,1), not per element.
    sls = jnp.sum(log_scale, axis=-1, keepdims=True)    # (1, 1)
    const = (-0.5 * d * _LOG_2PI) - sls                 # (1, 1)
    logp_ref[...] = const - _row_neg_half_sq_sum(eps)   # (1, TN) lane-dense store


def _log_prob_kernel(z_ref, loc_ref, log_scale_ref, logp_ref):
    """Log-prob of given samples for one row tile."""
    z = z_ref[...].astype(jnp.float32)
    loc = loc_ref[...].astype(jnp.float32)
    log_scale = log_scale_ref[...].astype(jnp.float32)

    eps = (z - loc) * jnp.exp(-log_scale)               # (TN, D)
    d = z.shape[-1]
    sls = jnp.sum(log_scale, axis=-1, keepdims=True)
    const = (-0.5 * d * _LOG_2PI) - sls
    logp_ref[...] = const - _row_neg_half_sq_sum(eps)


def _sample_kernel(eps_ref, loc_ref, log_scale_ref, z_ref):
    """Sample only: skips the log_p reduction and writeback entirely."""
    eps = eps_ref[...].astype(jnp.float32)
    loc = loc_ref[...].astype(jnp.float32)
    log_scale = log_scale_ref[...].astype(jnp.float32)
    z_ref[...] = (loc + jnp.exp(log_scale) * eps).astype(z_ref.dtype)


# ----------------------------------------------------------------------------
# Wrappers
# ----------------------------------------------------------------------------
def base_dist_forward(eps, loc, log_scale, *, tile_n=None):
    """eps: (N, D), loc/log_scale: (1, D) or (D,) -> (z (N, D), log_p (N,))."""
    n, d = eps.shape
    loc = loc.reshape(1, d)
    log_scale = log_scale.reshape(1, d)
    tn = _pick_tile_n(n, d) if tile_n is None else tile_n
    grid = (pl.cdiv(n, tn),)

    z, logp = pl.pallas_call(
        _forward_kernel,
        out_shape=(
            jax.ShapeDtypeStruct((n, d), eps.dtype),
            jax.ShapeDtypeStruct((1, n), jnp.float32),   # lane-dense log_p
        ),
        grid=grid,
        in_specs=[
            pl.BlockSpec((tn, d), lambda i: (i, 0)),     # row tile of eps
            pl.BlockSpec((1, d), lambda i: (0, 0)),      # resident params
            pl.BlockSpec((1, d), lambda i: (0, 0)),
        ],
        out_specs=(
            pl.BlockSpec((tn, d), lambda i: (i, 0)),     # row tile of z
            pl.BlockSpec((1, tn), lambda i: (0, i)),     # lane-dense log_p row
        ),
        compiler_params=pltpu.CompilerParams(
            dimension_semantics=("parallel",)),          # shard tiles across TCs
    )(eps, loc, log_scale)
    return z, logp.reshape(n)


def base_dist_log_prob(z, loc, log_scale, *, tile_n=None):
    """z: (N, D) -> log_p (N,)."""
    n, d = z.shape
    loc = loc.reshape(1, d)
    log_scale = log_scale.reshape(1, d)
    tn = _pick_tile_n(n, d) if tile_n is None else tile_n
    grid = (pl.cdiv(n, tn),)

    logp = pl.pallas_call(
        _log_prob_kernel,
        out_shape=jax.ShapeDtypeStruct((1, n), jnp.float32),
        grid=grid,
        in_specs=[
            pl.BlockSpec((tn, d), lambda i: (i, 0)),
            pl.BlockSpec((1, d), lambda i: (0, 0)),
            pl.BlockSpec((1, d), lambda i: (0, 0)),
        ],
        out_specs=pl.BlockSpec((1, tn), lambda i: (0, i)),
        compiler_params=pltpu.CompilerParams(
            dimension_semantics=("parallel",)),
    )(z, loc, log_scale)
    return logp.reshape(n)


def base_dist_sample(eps, loc, log_scale, *, tile_n=None):
    """eps: (N, D) -> z (N, D).  No log_p reduction / store."""
    n, d = eps.shape
    loc = loc.reshape(1, d)
    log_scale = log_scale.reshape(1, d)
    tn = _pick_tile_n(n, d) if tile_n is None else tile_n
    grid = (pl.cdiv(n, tn),)

    z = pl.pallas_call(
        _sample_kernel,
        out_shape=jax.ShapeDtypeStruct((n, d), eps.dtype),
        grid=grid,
        in_specs=[
            pl.BlockSpec((tn, d), lambda i: (i, 0)),
            pl.BlockSpec((1, d), lambda i: (0, 0)),
            pl.BlockSpec((1, d), lambda i: (0, 0)),
        ],
        out_specs=pl.BlockSpec((tn, d), lambda i: (i, 0)),
        compiler_params=pltpu.CompilerParams(
            dimension_semantics=("parallel",)),
    )(eps, loc, log_scale)
    return z


# ----------------------------------------------------------------------------
# Main
# ----------------------------------------------------------------------------
if __name__ == "__main__":
    D = 32              # latent dimensionality
    NUM_SAMPLES = 8

    # Deterministic parameter init (synthetic; no checkpoint load).
    loc = (0.1 * jnp.arange(D, dtype=jnp.float32)).reshape(1, D)
    log_scale = (-0.05 * jnp.arange(D, dtype=jnp.float32)).reshape(1, D)
    scale = jnp.exp(log_scale)

    # forward(num_samples): draw eps, then sample + log-prob in the kernel.
    key = jax.random.PRNGKey(0)
    eps = jax.random.normal(key, (NUM_SAMPLES, D), dtype=jnp.float32)

    z, log_p = base_dist_forward(eps, loc, log_scale)
    z = jax.block_until_ready(z)
    log_p = jax.block_until_ready(log_p)

    # log_prob(z) on the drawn samples.
    log_p2 = jax.block_until_ready(base_dist_log_prob(z, loc, log_scale))

    # sample(num_samples)
    z2 = jax.block_until_ready(base_dist_sample(eps, loc, log_scale))

    # Silent correctness checks against a pure-JAX reference.
    z_ref = loc + scale * eps
    logp_ref = (-0.5 * D * _LOG_2PI
                - jnp.sum(log_scale + 0.5 * eps * eps, axis=-1))
    assert np.allclose(np.asarray(z), np.asarray(z_ref), rtol=1e-5, atol=1e-5)
    assert np.allclose(np.asarray(log_p), np.asarray(logp_ref), rtol=1e-4, atol=1e-4)
    assert np.allclose(np.asarray(log_p2), np.asarray(logp_ref), rtol=1e-4, atol=1e-4)
    assert np.allclose(np.asarray(z2), np.asarray(z_ref), rtol=1e-5, atol=1e-5)
    assert z.shape == (NUM_SAMPLES, D) and log_p.shape == (NUM_SAMPLES,)

    # Exercise the multi-tile / ragged-N path: N=300 with TILE_N=128 -> 3 grid
    # steps, last block clamped (300 is neither a multiple of 128 nor of 8).
    N2 = 300
    eps2 = jax.random.normal(jax.random.PRNGKey(1), (N2, D), dtype=jnp.float32)
    z3, lp3 = base_dist_forward(eps2, loc, log_scale, tile_n=128)
    z3 = jax.block_until_ready(z3)
    lp3 = jax.block_until_ready(lp3)
    lp3b = jax.block_until_ready(base_dist_log_prob(z3, loc, log_scale, tile_n=128))
    z3_ref = loc + scale * eps2
    lp3_ref = (-0.5 * D * _LOG_2PI
               - jnp.sum(log_scale + 0.5 * eps2 * eps2, axis=-1))
    assert np.allclose(np.asarray(z3), np.asarray(z3_ref), rtol=1e-5, atol=1e-5)
    assert np.allclose(np.asarray(lp3), np.asarray(lp3_ref), rtol=1e-4, atol=1e-4)
    assert np.allclose(np.asarray(lp3b), np.asarray(lp3_ref), rtol=1e-4, atol=1e-4)

    print("KERNEL_OK")
</pallas_src>

<mosaic_0001>
module attributes {stable_mosaic.version = 11 : i64} {
  func.func @_forward_kernel(%arg0: i32, %arg1: memref<128x32xf32, #tpu.memory_space<vmem>>, %arg2: memref<1x32xf32, #tpu.memory_space<vmem>>, %arg3: memref<1x32xf32, #tpu.memory_space<vmem>>, %arg4: memref<128x32xf32, #tpu.memory_space<vmem>>, %arg5: memref<1x128xf32, #tpu.memory_space<vmem>>) attributes {dimension_semantics = [#tpu.dimension_semantics<parallel>], iteration_bounds = array<i64: 1>, scalar_prefetch = 0 : i64, scratch_operands = 0 : i64, tpu.core_type = #tpu.core_type<tc>, window_params = [{transform_indices = @transform_0, window_bounds = array<i64: 128, 32>}, {pipeline_mode = #tpu.pipeline_mode<synchronous>, transform_indices = @transform_1, window_bounds = array<i64: 1, 32>}, {pipeline_mode = #tpu.pipeline_mode<synchronous>, transform_indices = @transform_2, window_bounds = array<i64: 1, 32>}, {transform_indices = @transform_3, window_bounds = array<i64: 128, 32>}, {transform_indices = @transform_4, window_bounds = array<i64: 1, 128>}]} {
    %c0 = arith.constant 0 : index
    %c0_0 = arith.constant 0 : index
    %0 = vector.load %arg1[%c0, %c0_0] : memref<128x32xf32, #tpu.memory_space<vmem>>, vector<128x32xf32>
    %c0_1 = arith.constant 0 : index
    %c0_2 = arith.constant 0 : index
    %1 = vector.load %arg2[%c0_1, %c0_2] : memref<1x32xf32, #tpu.memory_space<vmem>>, vector<1x32xf32>
    %c0_3 = arith.constant 0 : index
    %c0_4 = arith.constant 0 : index
    %2 = vector.load %arg3[%c0_3, %c0_4] : memref<1x32xf32, #tpu.memory_space<vmem>>, vector<1x32xf32>
    %3 = math.exp %2 : vector<1x32xf32>
    %4 = vector.broadcast %3 : vector<1x32xf32> to vector<128x32xf32>
    %5 = arith.mulf %4, %0 : vector<128x32xf32>
    %6 = vector.broadcast %1 : vector<1x32xf32> to vector<128x32xf32>
    %7 = arith.addf %6, %5 : vector<128x32xf32>
    %c0_5 = arith.constant 0 : index
    %c0_6 = arith.constant 0 : index
    %8 = vector.load %arg4[%c0_5, %c0_6] : memref<128x32xf32, #tpu.memory_space<vmem>>, vector<128x32xf32>
    tpu.vector_store %arg4[%c0_5, %c0_6], %7 {strides = array<i32>} : memref<128x32xf32, #tpu.memory_space<vmem>>, vector<128x32xf32>,
    %cst = arith.constant dense<0.000000e+00> : vector<1xf32>
    %9 = vector.multi_reduction <add>, %2, %cst [1] : vector<1x32xf32> to vector<1xf32>
    %10 = vector.shape_cast %9 : vector<1xf32> to vector<1x1xf32>
    %cst_7 = arith.constant -29.4060326 : f32
    %11 = vector.broadcast %cst_7 : f32 to vector<1x1xf32>
    %12 = arith.subf %11, %10 : vector<1x1xf32>
    %cst_8 = arith.constant 5.000000e-01 : f32
    %13 = vector.broadcast %cst_8 : f32 to vector<128x32xf32>
    %14 = arith.mulf %13, %0 : vector<128x32xf32>
    %15 = arith.mulf %14, %0 : vector<128x32xf32>
    %cst_9 = arith.constant 1.000000e+00 : f32
    %16 = vector.broadcast %cst_9 : f32 to vector<1x32xf32>
    %cst_10 = arith.constant dense<0.000000e+00> : vector<1x128xf32>
    %17 = tpu.matmul %16, %15, %cst_10 {dimension_numbers = #tpu.dot_dimension_numbers<[1], [1], [0], [0], [0, 0, 1, 0], [], []>} : vector<1x32xf32>, vector<128x32xf32>, vector<1x128xf32> -> vector<1x128xf32>
    %18 = vector.broadcast %12 : vector<1x1xf32> to vector<1x128xf32>
    %19 = arith.subf %18, %17 : vector<1x128xf32>
    %c0_11 = arith.constant 0 : index
    %c0_12 = arith.constant 0 : index
    %20 = vector.load %arg5[%c0_11, %c0_12] : memref<1x128xf32, #tpu.memory_space<vmem>>, vector<1x128xf32>
    tpu.vector_store %arg5[%c0_11, %c0_12], %19 {strides = array<i32>} : memref<1x128xf32, #tpu.memory_space<vmem>>, vector<1x128xf32>,
    return
  }
  func.func @transform_0(%arg0: i32) -> (i32, i32) {
    %c0_i32 = arith.constant 0 : i32
    %c0_i32_0 = arith.constant 0 : i32
    return %arg0, %c0_i32 : i32, i32
  }
  func.func @transform_1(%arg0: i32) -> (i32, i32) {
    %c0_i32 = arith.constant 0 : i32
    %c0_i32_0 = arith.constant 0 : i32
    %c0_i32_1 = arith.constant 0 : i32
    return %c0_i32, %c0_i32_0 : i32, i32
  }
  func.func @transform_2(%arg0: i32) -> (i32, i32) {
    %c0_i32 = arith.constant 0 : i32
    %c0_i32_0 = arith.constant 0 : i32
    %c0_i32_1 = arith.constant 0 : i32
    return %c0_i32, %c0_i32_0 : i32, i32
  }
  func.func @transform_3(%arg0: i32) -> (i32, i32) {
    %c0_i32 = arith.constant 0 : i32
    %c0_i32_0 = arith.constant 0 : i32
    return %arg0, %c0_i32 : i32, i32
  }
  func.func @transform_4(%arg0: i32) -> (i32, i32) {
    %c0_i32 = arith.constant 0 : i32
    %c0_i32_0 = arith.constant 0 : i32
    return %c0_i32, %arg0 : i32, i32
  }
}

</mosaic_0001>

<llo_original>
// kernel: tpu_custom_call.1
$region0: #{tpu_custom_call.1}
  #allocation0 [shape = 'u32[]', space=smem, size = 0x4, offset = 0x4, fixed_abs, tag = 'smem constant byte address 0x4 - core index']
  #allocation1 [shape = 'u32[144,128]{1,0:T(1,128)}', space=vmem, size = 0x12000, scoped, tag = 'internal scratch']
  %s0 = inlined_call_operand.hbm [shape: f32[8,32], index: 0, kind: input, shape index: {}]
  %s1 = inlined_call_operand.vmem [shape: f32[1,32], index: 1, kind: input, shape index: {}]
  %s2 = inlined_call_operand.vmem [shape: f32[1,32], index: 2, kind: input, shape index: {}]
  %s3 = inlined_call_operand.hbm [shape: f32[8,32], index: 3, kind: output, shape index: {0}]
  %s4 = inlined_call_operand.hbm [shape: f32[1,8], index: 4, kind: output, shape index: {1}]
  %5 = xla_tuple %s3, %s4
  %s6 = sld [smem:[#allocation0]]
  $region34: #{tpu_custom_call.1} parent=0
    _
  %s8 = ssub.s32 1, %s6
  %s9 = scalar_select 0, %s8, %s6
  $region1: #{tpu_custom_call.1} parent=0
    #allocation2 [shape = 'u8[65536]{0}', space=vmem, size = 0x10000, scoped, tag = 'input window, operand 0, single buffered']
    #allocation3 [shape = 's32[1]{0}', space=sflag, size = 0x4, scoped, tag = 'scoped memory for tpu_custom_call.1']
    #allocation4 [shape = 's32[1]{0}', space=sflag, size = 0x4, scoped, tag = 'scoped memory for tpu_custom_call.1']
    #allocation5 [shape = 'u8[65536]{0}', space=vmem, size = 0x10000, scoped, tag = 'output window, operand 0, single buffered']
    #allocation6 [shape = 'u8[512]{0}', space=vmem, size = 0x400, scoped, tag = 'output window, operand 1, single buffered']
    #allocation7 [shape = 's32[1]{0}', space=sflag, size = 0x4, scoped, tag = 'scoped memory for tpu_custom_call.1']
    %10 = vsyncpa [#allocation3], 0
    %11 = vsyncpa [#allocation4], 0
    %12 = vsyncpa [#allocation7], 0
    // Predicated region
    $region2: #{tpu_custom_call.1} parent=1 // pred_check
      _
    $region3: #{tpu_custom_call.1} parent=1 // pred_check_branch
      %14 = sbr.rel (0) target = $region5
    $region4: #{tpu_custom_call.1} parent=1 // pred_region
      %s16 = ssub.s32 2048, 128
      %17 = vsyncadd [#allocation3], %s16
      %s18 = sshll.u32 [#allocation2], 4
      %s19 = int_to_ptr.vmem [resolvable:$true] %s18
      %24 = dma.hbm_to_vmem [thread:$0]  %s0, 128, %s19, [#allocation3], 128, 128, 8
    $region5: #{tpu_custom_call.1} parent=1 // pred_fallthru
      _
    // Predicated region
    $region6: #{tpu_custom_call.1} parent=1 // pred_check
      _
    $region7: #{tpu_custom_call.1} parent=1 // pred_check_branch
      %26 = sbr.rel (0) target = $region9
    $region8: #{tpu_custom_call.1} parent=1 // pred_region
      _
    $region9: #{tpu_custom_call.1} parent=1 // pred_fallthru
      _
    // Predicated region
    $region10: #{tpu_custom_call.1} parent=1 // pred_check
      _
    $region11: #{tpu_custom_call.1} parent=1 // pred_check_branch
      %28 = sbr.rel (0) target = $region13
    $region12: #{tpu_custom_call.1} parent=1 // pred_region
      _
    $region13: #{tpu_custom_call.1} parent=1 // pred_fallthru
      _
    // Predicated region
    $region14: #{tpu_custom_call.1} parent=1 // pred_check
      _
    $region15: #{tpu_custom_call.1} parent=1 // pred_check_branch
      %30 = sbr.rel (0) target = $region17
    $region16: #{tpu_custom_call.1} parent=1 // pred_region
      %31 = dma.done [#allocation3], 2048
    $region17: #{tpu_custom_call.1} parent=1 // pred_fallthru
      _
    %v32 = vld [vmem:[#allocation2] sm:$0xff]
    %v33 = vld [vmem:[#allocation2 + $0x8] sm:$0xff]
    %v34 = vld [vmem:[#allocation2 + $0x10] sm:$0xff]
    %v35 = vld [vmem:[#allocation2 + $0x18] sm:$0xff]
    %v36 = vld [vmem:[#allocation2 + $0x20] sm:$0xff]
    %v37 = vld [vmem:[#allocation2 + $0x28] sm:$0xff]
    %v38 = vld [vmem:[#allocation2 + $0x30] sm:$0xff]
    %v39 = vld [vmem:[#allocation2 + $0x38] sm:$0xff]
    %v40 = vld [vmem:[#allocation2 + $0x40] sm:$0xff]
    %v41 = vld [vmem:[#allocation2 + $0x48] sm:$0xff]
    %v42 = vld [vmem:[#allocation2 + $0x50] sm:$0xff]
    %v43 = vld [vmem:[#allocation2 + $0x58] sm:$0xff]
    %v44 = vld [vmem:[#allocation2 + $0x60] sm:$0xff]
    %v45 = vld [vmem:[#allocation2 + $0x68] sm:$0xff]
    %v46 = vld [vmem:[#allocation2 + $0x70] sm:$0xff]
    %v47 = vld [vmem:[#allocation2 + $0x78] sm:$0xff]
    %v48 = vld [vmem:[%s1] sm:$0x1]
    %v49 = vld [vmem:[%s2] sm:$0x1]
    %v50 = vmul.f32 %v49, 1.442695
    %v51 = vpow.pop %v50
    %v53 = vlaneseq
    %v54 = vshrl.u32 %v53, 7
    %v55 = vsub.s32 0, %v54
    %v56 = vrot.slane %v51, %v55
    %v58 = vmul.f32 %v56, %v32
    %v59 = vmul.f32 %v56, %v33
    %v60 = vmul.f32 %v56, %v34
    %v61 = vmul.f32 %v56, %v35
    %v62 = vmul.f32 %v56, %v36
    %v63 = vmul.f32 %v56, %v37
    %v64 = vmul.f32 %v56, %v38
    %v65 = vmul.f32 %v56, %v39
    %v66 = vmul.f32 %v56, %v40
    %v67 = vmul.f32 %v56, %v41
    %v68 = vmul.f32 %v56, %v42
    %v69 = vmul.f32 %v56, %v43
    %v70 = vmul.f32 %v56, %v44
    %v71 = vmul.f32 %v56, %v45
    %v72 = vmul.f32 %v56, %v46
    %v73 = vmul.f32 %v56, %v47
    %v75 = vlaneseq
    %v76 = vshrl.u32 %v75, 7
    %v77 = vsub.s32 0, %v76
    %v78 = vrot.slane %v48, %v77
    %v80 = vadd.f32 %v78, %v58
    %v81 = vadd.f32 %v78, %v59
    %v82 = vadd.f32 %v78, %v60
    %v83 = vadd.f32 %v78, %v61
    %v84 = vadd.f32 %v78, %v62
    %v85 = vadd.f32 %v78, %v63
    %v86 = vadd.f32 %v78, %v64
    %v87 = vadd.f32 %v78, %v65
    %v88 = vadd.f32 %v78, %v66
    %v89 = vadd.f32 %v78, %v67
    %v90 = vadd.f32 %v78, %v68
    %v91 = vadd.f32 %v78, %v69
    %v92 = vadd.f32 %v78, %v70
    %v93 = vadd.f32 %v78, %v71
    %v94 = vadd.f32 %v78, %v72
    %v95 = vadd.f32 %v78, %v73
    %vm96 = vcmask 261120
    %97 = vst.msk [vmem:[#allocation5] sm:$0xff] %vm96, %v80
    %98 = vst.msk [vmem:[#allocation5 + $0x8] sm:$0xff] %vm96, %v81
    %99 = vst.msk [vmem:[#allocation5 + $0x10] sm:$0xff] %vm96, %v82
    %100 = vst.msk [vmem:[#allocation5 + $0x18] sm:$0xff] %vm96, %v83
    %101 = vst.msk [vmem:[#allocation5 + $0x20] sm:$0xff] %vm96, %v84
    %102 = vst.msk [vmem:[#allocation5 + $0x28] sm:$0xff] %vm96, %v85
    %103 = vst.msk [vmem:[#allocation5 + $0x30] sm:$0xff] %vm96, %v86
    %104 = vst.msk [vmem:[#allocation5 + $0x38] sm:$0xff] %vm96, %v87
    %105 = vst.msk [vmem:[#allocation5 + $0x40] sm:$0xff] %vm96, %v88
    %106 = vst.msk [vmem:[#allocation5 + $0x48] sm:$0xff] %vm96, %v89
    %107 = vst.msk [vmem:[#allocation5 + $0x50] sm:$0xff] %vm96, %v90
    %108 = vst.msk [vmem:[#allocation5 + $0x58] sm:$0xff] %vm96, %v91
    %109 = vst.msk [vmem:[#allocation5 + $0x60] sm:$0xff] %vm96, %v92
    %110 = vst.msk [vmem:[#allocation5 + $0x68] sm:$0xff] %vm96, %v93
    %111 = vst.msk [vmem:[#allocation5 + $0x70] sm:$0xff] %vm96, %v94
    %112 = vst.msk [vmem:[#allocation5 + $0x78] sm:$0xff] %vm96, %v95
    %vm113 = vcmask 253952
    %v114 = vsel %vm113, %v49, 0.0
    %115 = vadd.xlane.f32.xlu0 %v114
    %v116 = vpop.xlane.xlu0 %115
    %v117 = vsub.f32 -29.406033, %v116
    %v118 = vmul.f32 %v32, 0.5
    %v119 = vmul.f32 %v33, 0.5
    %v120 = vmul.f32 %v34, 0.5
    %v121 = vmul.f32 %v35, 0.5
    %v122 = vmul.f32 %v36, 0.5
    %v123 = vmul.f32 %v37, 0.5
    %v124 = vmul.f32 %v38, 0.5
    %v125 = vmul.f32 %v39, 0.5
    %v126 = vmul.f32 %v40, 0.5
    %v127 = vmul.f32 %v41, 0.5
    %v128 = vmul.f32 %v42, 0.5
    %v129 = vmul.f32 %v43, 0.5
    %v130 = vmul.f32 %v44, 0.5
    %v131 = vmul.f32 %v45, 0.5
    %v132 = vmul.f32 %v46, 0.5
    %v133 = vmul.f32 %v47, 0.5
    %v134 = vmul.f32 %v118, %v32
    %v135 = vmul.f32 %v119, %v33
    %v136 = vmul.f32 %v120, %v34
    %v137 = vmul.f32 %v121, %v35
    %v138 = vmul.f32 %v122, %v36
    %v139 = vmul.f32 %v123, %v37
    %v140 = vmul.f32 %v124, %v38
    %v141 = vmul.f32 %v125, %v39
    %v142 = vmul.f32 %v126, %v40
    %v143 = vmul.f32 %v127, %v41
    %v144 = vmul.f32 %v128, %v42
    %v145 = vmul.f32 %v129, %v43
    %v146 = vmul.f32 %v130, %v44
    %v147 = vmul.f32 %v131, %v45
    %v148 = vmul.f32 %v132, %v46
    %v149 = vmul.f32 %v133, %v47
    %v151 = vsel %vm96, 1.0, 0
    %v154 = vsel %vm96, %v134, 0
    %v157 = vsel %vm96, %v135, 0
    %v160 = vsel %vm96, %v136, 0
    %v163 = vsel %vm96, %v137, 0
    %v166 = vsel %vm96, %v138, 0
    %v169 = vsel %vm96, %v139, 0
    %v172 = vsel %vm96, %v140, 0
    %v175 = vsel %vm96, %v141, 0
    %v178 = vsel %vm96, %v142, 0
    %v181 = vsel %vm96, %v143, 0
    %v184 = vsel %vm96, %v144, 0
    %v187 = vsel %vm96, %v145, 0
    %v190 = vsel %vm96, %v146, 0
    %v193 = vsel %vm96, %v147, 0
    %v196 = vsel %vm96, %v148, 0
    %v199 = vsel %vm96, %v149, 0
    %201 = vmatprep.subr.mxu0 0.0
    %202 = vmatpush1.xpose.msra.mxu0 %v154
    %203 = vmatprep.subr.mxu0 0.0
    %204 = vmatpush1.xpose.msra.mxu0 %v157
    %205 = vmatprep.subr.mxu0 0.0
    %206 = vmatpush1.xpose.msra.mxu0 %v160
    %207 = vmatprep.subr.mxu0 0.0
    %208 = vmatpush1.xpose.msra.mxu0 %v163
    %209 = vmatprep.subr.mxu0 0.0
    %210 = vmatpush1.xpose.msra.mxu0 %v166
    %211 = vmatprep.subr.mxu0 0.0
    %212 = vmatpush1.xpose.msra.mxu0 %v169
    %213 = vmatprep.subr.mxu0 0.0
    %214 = vmatpush1.xpose.msra.mxu0 %v172
    %215 = vmatprep.subr.mxu0 0.0
    %216 = vmatpush1.xpose.msra.mxu0 %v175
    %217 = vmatprep.subr.mxu0 0.0
    %218 = vmatpush1.xpose.msra.mxu0 %v178
    %219 = vmatprep.subr.mxu0 0.0
    %220 = vmatpush1.xpose.msra.mxu0 %v181
    %221 = vmatprep.subr.mxu0 0.0
    %222 = vmatpush1.xpose.msra.mxu0 %v184
    %223 = vmatprep.subr.mxu0 0.0
    %224 = vmatpush1.xpose.msra.mxu0 %v187
    %225 = vmatprep.subr.mxu0 0.0
    %226 = vmatpush1.xpose.msra.mxu0 %v190
    %227 = vmatprep.subr.mxu0 0.0
    %228 = vmatpush1.xpose.msra.mxu0 %v193
    %229 = vmatprep.subr.mxu0 0.0
    %230 = vmatpush1.xpose.msra.mxu0 %v196
    %231 = vmatprep.subr.mxu0 0.0
    %232 = vmatpush1.xpose.msra.mxu0 %v199
    %233 = vmatprep.subr.mxu0 0.0
    %234 = vmatpush1.xpose.msra.mxu0 0.0
    %235 = vmatprep.subr.mxu0 0.0
    %236 = vmatpush1.xpose.msra.mxu0 0.0
    %237 = vmatprep.subr.mxu0 0.0
    %238 = vmatpush1.xpose.msra.mxu0 0.0
    %239 = vmatprep.subr.mxu0 0.0
    %240 = vmatpush1.xpose.msra.mxu0 0.0
    %241 = vmatprep.subr.mxu0 0.0
    %242 = vmatpush1.xpose.msra.mxu0 0.0
    %243 = vmatprep.subr.mxu0 0.0
    %244 = vmatpush1.xpose.msra.mxu0 0.0
    %245 = vmatprep.subr.mxu0 0.0
    %246 = vmatpush1.xpose.msra.mxu0 0.0
    %247 = vmatprep.subr.mxu0 0.0
    %248 = vmatpush1.xpose.msra.mxu0 0.0
    %249 = vmatprep.subr.mxu0 0.0
    %250 = vmatpush1.xpose.msra.mxu0 0.0
    %251 = vmatprep.subr.mxu0 0.0
    %252 = vmatpush1.xpose.msra.mxu0 0.0
    %253 = vmatprep.subr.mxu0 0.0
    %254 = vmatpush1.xpose.msra.mxu0 0.0
    %255 = vmatprep.subr.mxu0 0.0
    %256 = vmatpush1.xpose.msra.mxu0 0.0
    %257 = vmatprep.subr.mxu0 0.0
    %258 = vmatpush1.xpose.msra.mxu0 0.0
    %259 = vmatprep.subr.mxu0 0.0
    %260 = vmatpush1.xpose.msra.mxu0 0.0
    %261 = vmatprep.subr.mxu0 0.0
    %262 = vmatpush1.xpose.msra.mxu0 0.0
    %263 = vmatprep.subr.mxu0 0.0
    %264 = vmatpush1.xpose.msra.mxu0 0.0
    %265 = vmatprep.mubr.f32.mxu0 0.0
    %266 = vmatmul.mubr.f32.gmra.mrb[0].mxu0 %v151
    %v267 = vpop.f32.mrb[0].mxu0
    %v268 = vadd.f32 0.0, %v267
    %v269 = vpop.f32.mrb[0].mxu0
    %270 = vdwg.mxu0
    %v271 = vsub.f32 %v117, %v268
    %272 = vst [vmem:[#allocation6] sm:$0x1] %v271
    // Predicated region
    $region18: #{tpu_custom_call.1} parent=1 // pred_check
      _
    $region19: #{tpu_custom_call.1} parent=1 // pred_check_branch
      %274 = sbr.rel (0) target = $region21
    $region20: #{tpu_custom_call.1} parent=1 // pred_region
      %s276 = ssub.s32 2048, 128
      %277 = vsyncadd [#allocation4], %s276
      %s278 = sshll.u32 [#allocation5], 4
      %s279 = int_to_ptr.vmem [resolvable:$true] %s278
      %284 = dma.vmem_to_hbm [thread:$0]  %s279, 128, %s3, [#allocation4], 128, 128, 8
    $region21: #{tpu_custom_call.1} parent=1 // pred_fallthru
      _
    // Predicated region
    $region22: #{tpu_custom_call.1} parent=1 // pred_check
      _
    $region23: #{tpu_custom_call.1} parent=1 // pred_check_branch
      %286 = sbr.rel (0) target = $region25
    $region24: #{tpu_custom_call.1} parent=1 // pred_region
      %s288 = ssub.s32 16, 16
      %289 = vsyncadd [#allocation7], %s288
      %s291 = sshll.u32 [#allocation6], 4
      %s292 = int_to_ptr.vmem [resolvable:$true] %s291
      %294 = dma.vmem_to_hbm [thread:$0]  %s292, 16, %s4, [#allocation7]
    $region25: #{tpu_custom_call.1} parent=1 // pred_fallthru
      _
    // Predicated region
    $region26: #{tpu_custom_call.1} parent=1 // pred_check
      _
    $region27: #{tpu_custom_call.1} parent=1 // pred_check_branch
      %296 = sbr.rel (0) target = $region29
    $region28: #{tpu_custom_call.1} parent=1 // pred_region
      %297 = dma.done [#allocation4], 2048
    $region29: #{tpu_custom_call.1} parent=1 // pred_fallthru
      _
    // Predicated region
    $region30: #{tpu_custom_call.1} parent=1 // pred_check
      _
    $region31: #{tpu_custom_call.1} parent=1 // pred_check_branch
      %299 = sbr.rel (0) target = $region33
    $region32: #{tpu_custom_call.1} parent=1 // pred_region
      %300 = dma.done [#allocation7], 16
    $region33: #{tpu_custom_call.1} parent=1 // pred_fallthru
      _
    %301 = vsyncpa [#allocation3], 1
    %302 = vsyncpa [#allocation4], 1
    %303 = vsyncpa [#allocation7], 1

</llo_original>
